<compile_context>
chip_gen: v7x
topology: tpu7x:2x2x1
jax: 0.10.0
libtpu: 0.0.40
codegen_flags: <defaults>
</compile_context>

<pallas_src>
import functools

import jax
import jax.numpy as jnp
from jax.experimental import pallas as pl
from jax.experimental.pallas import tpu as pltpu


# ---------------------------------------------------------------------------
# Hardware-aware configuration (queried lazily, cached).
# ---------------------------------------------------------------------------
@functools.lru_cache(maxsize=None)
def _chip_kind():
    try:
        return jax.devices()[0].device_kind.lower()
    except Exception:
        return ""


@functools.lru_cache(maxsize=None)
def _vmem_budgets():
    """(scoped VMEM limit, tile budget, minimum grid steps) per TPU generation."""
    kind = _chip_kind()
    if ("v5" in kind) or ("v6" in kind):
        # 128 MiB physical VMEM, single TensorCore per chip: big tiles, no step floor.
        return 64 * 1024 * 1024, 48 * 1024 * 1024, 1
    # v7x (64 MiB per TensorCore, 2 TCs) and unknown chips: conservative budget,
    # keep >= 4 grid steps (>= 2 per core) so the "parallel" axis can megacore-shard.
    return 32 * 1024 * 1024, 20 * 1024 * 1024, 4


@functools.lru_cache(maxsize=None)
def _buffered_weights_supported():
    """Feature-probe pl.Buffered(1) once (single-buffered grid-invariant inputs)."""
    try:
        def _copy(x_ref, o_ref):
            o_ref[...] = x_ref[...]

        call = pl.pallas_call(
            _copy,
            out_shape=jax.ShapeDtypeStruct((8, 128), jnp.float32),
            grid_spec=pltpu.PrefetchScalarGridSpec(
                num_scalar_prefetch=0,
                grid=(1,),
                in_specs=[pl.BlockSpec((8, 128), lambda i: (0, 0),
                                       pipeline_mode=pl.Buffered(1))],
                out_specs=pl.BlockSpec((8, 128), lambda i: (0, 0)),
            ),
        )
        jax.jit(call).lower(jax.ShapeDtypeStruct((8, 128), jnp.float32)).compile()
        return True
    except Exception:
        return False


# ---------------------------------------------------------------------------
# Kernel body.
# ---------------------------------------------------------------------------
def _gated_attention_kernel(x_ref, wab_ref, bab_ref, wc_ref, bc_ref, out_ref, *,
                            hidden_dim, low_precision_act):
    """A = (tanh(x@Wa+ba) * sigmoid(x@Wb+bb)) @ Wc + bc for one row tile.

    wab_ref : [D, 2H]   fused [Wa | Wb]
    bab_ref : [1, 2H]   fused [ba | bb]
    wc_ref  : [1, H] when n_classes == 1 (VPU/XLU path), else [H, C] (MXU path)
    bc_ref  : [1, C]
    """
    x = x_ref[...]
    # Fused input projection on the MXU (one weight stream); accumulate in f32.
    z = jnp.dot(x, wab_ref[...], preferred_element_type=jnp.float32)
    z = z + bab_ref[...].astype(jnp.float32)

    # Gating activations: bf16 on bf16 inputs (bf16-capable EUP/VPU on v6e/v7x),
    # otherwise f32.
    act_dtype = x.dtype if low_precision_act else jnp.float32
    z = z.astype(act_dtype)
    a = jnp.tanh(z[:, :hidden_dim])            # EUP transcendental
    b = jax.nn.sigmoid(z[:, hidden_dim:])      # EUP logistic path
    gated = a * b                              # VPU

    if out_ref.shape[-1] == 1:
        # n_classes == 1: a 1-lane-wide MXU matmul would waste 127/128 result lanes.
        # VPU broadcast-multiply + XLU lane reduction (f32 accumulation) instead.
        wc_row = wc_ref[...].astype(jnp.float32)                        # (1, H)
        A = jnp.sum(gated.astype(jnp.float32) * wc_row, axis=-1, keepdims=True)
    else:
        # Canonical [K, N] RHS in its native dtype; `gated` stays in the MXU-native
        # input dtype (bf16 stays bf16), accumulation in f32.
        A = jnp.dot(gated, wc_ref[...], preferred_element_type=jnp.float32)

    out_ref[...] = (A + bc_ref[...].astype(jnp.float32)).astype(out_ref.dtype)


# ---------------------------------------------------------------------------
# Tiling heuristic.
# ---------------------------------------------------------------------------
def _choose_row_tile(n_rows, d, h, c, x_itemsize, param_itemsize,
                     vmem_budget_bytes, min_steps, weights_single_buffered):
    """Largest sublane-friendly row tile that fits the VMEM budget."""
    max_tile = 1024
    if n_rows <= max_tile:
        return n_rows                          # single grid step, block == full extent
    n_weight_bufs = 1 if weights_single_buffered else 2
    weight_bytes = n_weight_bufs * (d * 2 * h + 2 * h + max(h * c, h) + c) * param_itemsize
    per_row_bytes = (2 * d * x_itemsize        # x tile, double buffered
                     + 2 * c * x_itemsize      # output tile, double buffered
                     + 5 * h * 4               # f32 intermediates: z (2H) + a + b + gated
                     + c * 4)                  # A (f32)
    avail = max(vmem_budget_bytes - weight_bytes, 128 * per_row_bytes)
    tile = min(avail // per_row_bytes, max_tile)
    if min_steps > 1:
        # Keep >= min_steps grid steps so the "parallel" row axis can shard
        # across both TensorCores on v7x.
        cap = max(128, (pl.cdiv(n_rows, min_steps) // 128) * 128)
        tile = min(tile, cap)
    return int(max(128, (tile // 128) * 128))


# ---------------------------------------------------------------------------
# Jitted pallas_call wrapper.
# ---------------------------------------------------------------------------
@functools.partial(jax.jit, static_argnames=(
    "row_tile", "vmem_limit_bytes", "use_buffered", "low_precision_act"))
def _attention_scores(x, w_ab, b_ab, wc_arg, bc, *, row_tile, vmem_limit_bytes,
                      use_buffered, low_precision_act):
    n_rows, d = x.shape
    two_h = w_ab.shape[1]
    n_classes = bc.shape[1]
    grid = (pl.cdiv(n_rows, row_tile),)        # ragged last block: no padding copy

    # Grid-invariant weights/biases: single-buffer when supported so the saved
    # VMEM can be spent on a larger x tile.
    w_kwargs = dict(pipeline_mode=pl.Buffered(1)) if use_buffered else {}
    in_specs = [
        pl.BlockSpec((row_tile, d), lambda i: (i, 0)),                 # x (streams)
        pl.BlockSpec((d, two_h), lambda i: (0, 0), **w_kwargs),        # [Wa | Wb]
        pl.BlockSpec((1, two_h), lambda i: (0, 0), **w_kwargs),        # [ba | bb]
        pl.BlockSpec(wc_arg.shape, lambda i: (0, 0), **w_kwargs),      # Wc
        pl.BlockSpec((1, n_classes), lambda i: (0, 0), **w_kwargs),    # bc
    ]
    kernel = functools.partial(_gated_attention_kernel,
                               hidden_dim=two_h // 2,
                               low_precision_act=low_precision_act)
    return pl.pallas_call(
        kernel,
        out_shape=jax.ShapeDtypeStruct((n_rows, n_classes), x.dtype),
        grid_spec=pltpu.PrefetchScalarGridSpec(
            num_scalar_prefetch=0,
            grid=grid,
            in_specs=in_specs,
            out_specs=pl.BlockSpec((row_tile, n_classes), lambda i: (i, 0)),
        ),
        compiler_params=pltpu.CompilerParams(
            dimension_semantics=("parallel",),     # rows are independent
            vmem_limit_bytes=vmem_limit_bytes,
        ),
    )(x, w_ab, b_ab, wc_arg, bc)


# ---------------------------------------------------------------------------
# Public API.
# ---------------------------------------------------------------------------
def pack_params(wa, ba, wb, bb, wc, bc):
    """One-time weight packing (hoisted out of the per-call hot path)."""
    w_ab = jnp.concatenate([wa, wb], axis=1)                                   # [D, 2H]
    b_ab = jnp.concatenate([jnp.reshape(ba, (1, -1)), jnp.reshape(bb, (1, -1))], axis=1)
    n_classes = wc.shape[1]
    wc_arg = wc.T if n_classes == 1 else wc      # (1, H) for C==1, else canonical (H, C)
    bc_arg = jnp.reshape(bc, (1, -1))
    return w_ab, b_ab, wc_arg, bc_arg


def attention_net_gated_packed(x, packed, *, row_tile=None):
    """x: [N, D]; packed = pack_params(...). Returns (A, x) with A: [N, C]."""
    w_ab, b_ab, wc_arg, bc_arg = packed
    n_rows, d = x.shape
    h = w_ab.shape[1] // 2
    c = bc_arg.shape[1]
    vmem_limit, vmem_budget, min_steps = _vmem_budgets()
    use_buffered = _buffered_weights_supported()
    if row_tile is None:
        row_tile = _choose_row_tile(n_rows, d, h, c, x.dtype.itemsize,
                                    w_ab.dtype.itemsize, vmem_budget, min_steps,
                                    use_buffered)
    row_tile = int(min(row_tile, n_rows))
    if row_tile < n_rows:
        row_tile = max(8, (row_tile // 8) * 8)   # sublane-aligned unless full extent

    low_precision_act = (x.dtype == jnp.bfloat16) and not any(
        g in _chip_kind() for g in ("v2", "v3", "v4", "v5"))

    A = _attention_scores(x, w_ab, b_ab, wc_arg, bc_arg,
                          row_tile=row_tile,
                          vmem_limit_bytes=vmem_limit,
                          use_buffered=use_buffered,
                          low_precision_act=low_precision_act)
    return A, x


def attention_net_gated(x, wa, ba, wb, bb, wc, bc, *, row_tile=None):
    """Convenience wrapper matching the module's parameter layout.

    x: [N, D]; wa/wb: [D, H]; ba/bb: [1, H]; wc: [H, C]; bc: [1, C].
    Returns (A, x), the eval-mode forward of AttentionNetGated.
    """
    return attention_net_gated_packed(x, pack_params(wa, ba, wb, bb, wc, bc),
                                      row_tile=row_tile)


# ---------------------------------------------------------------------------
# Reference / test harness.
# ---------------------------------------------------------------------------
def _init_linear(key, in_features, out_features, dtype=jnp.float32):
    """PyTorch nn.Linear-style init; weight returned as [in_features, out_features]."""
    kw, kb = jax.random.split(key)
    bound = 1.0 / jnp.sqrt(in_features)
    w = jax.random.uniform(kw, (in_features, out_features), dtype,
                           minval=-bound, maxval=bound)
    b = jax.random.uniform(kb, (1, out_features), dtype,
                           minval=-bound, maxval=bound)
    return w, b


def _reference(x, wa, ba, wb, bb, wc, bc):
    a = jnp.tanh(x @ wa + ba)
    b = jax.nn.sigmoid(x @ wb + bb)
    return (a * b) @ wc + bc


if __name__ == "__main__":
    key = jax.random.PRNGKey(0)
    kx, ka, kb, kc, kx2 = jax.random.split(key, 5)

    # Case 1: n_classes == 1 (gating-score path); N not a multiple of 8.
    N, input_dim, hidden_dim, n_classes = 37, 32, 32, 1
    x = jax.random.normal(kx, (N, input_dim), jnp.float32)
    wa, ba = _init_linear(ka, input_dim, hidden_dim)     # attention_a Linear
    wb, bb = _init_linear(kb, input_dim, hidden_dim)     # attention_b Linear
    wc, bc = _init_linear(kc, hidden_dim, n_classes)     # attention_c Linear

    A, x_out = attention_net_gated(x, wa, ba, wb, bb, wc, bc)
    A = jax.block_until_ready(A)
    A_ref = _reference(x, wa, ba, wb, bb, wc, bc)
    assert A.shape == (N, n_classes)
    assert x_out.shape == x.shape
    assert jnp.allclose(A, A_ref, atol=1e-5, rtol=1e-5)
    assert jnp.array_equal(x_out, x)

    # Case 2: multi-step grid with a ragged last tile (no padding copy of x).
    N2 = 300
    x2 = jax.random.normal(kx2, (N2, input_dim), jnp.float32)
    packed = pack_params(wa, ba, wb, bb, wc, bc)         # weight prep hoisted once
    A2, _ = attention_net_gated_packed(x2, packed, row_tile=128)
    A2 = jax.block_until_ready(A2)
    A2_ref = _reference(x2, wa, ba, wb, bb, wc, bc)
    assert A2.shape == (N2, n_classes)
    assert jnp.allclose(A2, A2_ref, atol=1e-5, rtol=1e-5)

    # Case 3: n_classes > 1 exercises the MXU path for attention_c.
    C3 = 4
    wc3, bc3 = _init_linear(kc, hidden_dim, C3)
    A3, _ = attention_net_gated(x, wa, ba, wb, bb, wc3, bc3)
    A3 = jax.block_until_ready(A3)
    A3_ref = _reference(x, wa, ba, wb, bb, wc3, bc3)
    assert A3.shape == (N, C3)
    assert jnp.allclose(A3, A3_ref, atol=1e-5, rtol=1e-5)

    # Case 4: bf16 inputs stream the MXU (and EUP on v6e/v7x) in bf16, f32 accumulation.
    params16 = [p.astype(jnp.bfloat16) for p in (wa, ba, wb, bb, wc, bc)]
    x16 = x.astype(jnp.bfloat16)
    A16, _ = attention_net_gated(x16, *params16)
    A16 = jax.block_until_ready(A16)
    A16_ref = _reference(x16.astype(jnp.float32),
                         *[p.astype(jnp.float32) for p in params16])
    assert jnp.allclose(A16.astype(jnp.float32), A16_ref, atol=5e-2, rtol=5e-2)

    print("KERNEL_OK")
</pallas_src>

<mosaic_0001>
module attributes {stable_mosaic.version = 11 : i64} {
  func.func @_gated_attention_kernel(%arg0: i32, %arg1: memref<37x32xf32, #tpu.memory_space<vmem>>, %arg2: memref<32x64xf32, #tpu.memory_space<vmem>>, %arg3: memref<1x64xf32, #tpu.memory_space<vmem>>, %arg4: memref<1x32xf32, #tpu.memory_space<vmem>>, %arg5: memref<1x1xf32, #tpu.memory_space<vmem>>, %arg6: memref<37x1xf32, #tpu.memory_space<vmem>>) attributes {dimension_semantics = [#tpu.dimension_semantics<parallel>], iteration_bounds = array<i64: 1>, scalar_prefetch = 0 : i64, scratch_operands = 0 : i64, tpu.core_type = #tpu.core_type<tc>, window_params = [{transform_indices = @transform_0, window_bounds = array<i64: 37, 32>}, {pipeline_mode = #tpu.pipeline_mode<synchronous>, transform_indices = @transform_1, window_bounds = array<i64: 32, 64>}, {pipeline_mode = #tpu.pipeline_mode<synchronous>, transform_indices = @transform_2, window_bounds = array<i64: 1, 64>}, {pipeline_mode = #tpu.pipeline_mode<synchronous>, transform_indices = @transform_3, window_bounds = array<i64: 1, 32>}, {pipeline_mode = #tpu.pipeline_mode<synchronous>, transform_indices = @transform_4, window_bounds = array<i64: 1, 1>}, {transform_indices = @transform_5, window_bounds = array<i64: 37, 1>}]} {
    %c0 = arith.constant 0 : index
    %c0_0 = arith.constant 0 : index
    %0 = vector.load %arg1[%c0, %c0_0] : memref<37x32xf32, #tpu.memory_space<vmem>>, vector<37x32xf32>
    %c0_1 = arith.constant 0 : index
    %c0_2 = arith.constant 0 : index
    %1 = vector.load %arg2[%c0_1, %c0_2] : memref<32x64xf32, #tpu.memory_space<vmem>>, vector<32x64xf32>
    %cst = arith.constant dense<0.000000e+00> : vector<37x64xf32>
    %2 = tpu.matmul %0, %1, %cst {dimension_numbers = #tpu.dot_dimension_numbers<[1], [0], [0], [1], [0, 0, 1, 1], [], []>} : vector<37x32xf32>, vector<32x64xf32>, vector<37x64xf32> -> vector<37x64xf32>
    %c0_3 = arith.constant 0 : index
    %c0_4 = arith.constant 0 : index
    %3 = vector.load %arg3[%c0_3, %c0_4] : memref<1x64xf32, #tpu.memory_space<vmem>>, vector<1x64xf32>
    %4 = vector.broadcast %3 : vector<1x64xf32> to vector<37x64xf32>
    %5 = arith.addf %2, %4 : vector<37x64xf32>
    %6 = vector.extract_strided_slice %5 {offsets = [0, 0], sizes = [37, 32], strides = [1, 1]} : vector<37x64xf32> to vector<37x32xf32>
    %7 = math.tanh %6 : vector<37x32xf32>
    %8 = vector.extract_strided_slice %5 {offsets = [0, 32], sizes = [37, 32], strides = [1, 1]} : vector<37x64xf32> to vector<37x32xf32>
    %9 = arith.negf %8 : vector<37x32xf32>
    %10 = math.exp %9 : vector<37x32xf32>
    %cst_5 = arith.constant 1.000000e+00 : f32
    %11 = vector.broadcast %cst_5 : f32 to vector<37x32xf32>
    %12 = arith.addf %11, %10 : vector<37x32xf32>
    %13 = arith.divf %11, %12 : vector<37x32xf32>
    %14 = arith.mulf %7, %13 : vector<37x32xf32>
    %c0_6 = arith.constant 0 : index
    %c0_7 = arith.constant 0 : index
    %15 = vector.load %arg4[%c0_6, %c0_7] : memref<1x32xf32, #tpu.memory_space<vmem>>, vector<1x32xf32>
    %16 = vector.broadcast %15 : vector<1x32xf32> to vector<37x32xf32>
    %17 = arith.mulf %14, %16 : vector<37x32xf32>
    %cst_8 = arith.constant dense<0.000000e+00> : vector<37xf32>
    %18 = vector.multi_reduction <add>, %17, %cst_8 [1] : vector<37x32xf32> to vector<37xf32>
    %19 = vector.shape_cast %18 : vector<37xf32> to vector<37x1xf32>
    %c0_9 = arith.constant 0 : index
    %c0_10 = arith.constant 0 : index
    %20 = vector.load %arg5[%c0_9, %c0_10] : memref<1x1xf32, #tpu.memory_space<vmem>>, vector<1x1xf32>
    %21 = vector.broadcast %20 : vector<1x1xf32> to vector<37x1xf32>
    %22 = arith.addf %19, %21 : vector<37x1xf32>
    %c0_11 = arith.constant 0 : index
    %c0_12 = arith.constant 0 : index
    %23 = vector.load %arg6[%c0_11, %c0_12] : memref<37x1xf32, #tpu.memory_space<vmem>>, vector<37x1xf32>
    tpu.vector_store %arg6[%c0_11, %c0_12], %22 {strides = array<i32>} : memref<37x1xf32, #tpu.memory_space<vmem>>, vector<37x1xf32>,
    return
  }
  func.func @transform_0(%arg0: i32) -> (i32, i32) {
    %c0_i32 = arith.constant 0 : i32
    %c0_i32_0 = arith.constant 0 : i32
    return %arg0, %c0_i32 : i32, i32
  }
  func.func @transform_1(%arg0: i32) -> (i32, i32) {
    %c0_i32 = arith.constant 0 : i32
    %c0_i32_0 = arith.constant 0 : i32
    %c0_i32_1 = arith.constant 0 : i32
    return %c0_i32, %c0_i32_0 : i32, i32
  }
  func.func @transform_2(%arg0: i32) -> (i32, i32) {
    %c0_i32 = arith.constant 0 : i32
    %c0_i32_0 = arith.constant 0 : i32
    %c0_i32_1 = arith.constant 0 : i32
    return %c0_i32, %c0_i32_0 : i32, i32
  }
  func.func @transform_3(%arg0: i32) -> (i32, i32) {
    %c0_i32 = arith.constant 0 : i32
    %c0_i32_0 = arith.constant 0 : i32
    %c0_i32_1 = arith.constant 0 : i32
    return %c0_i32, %c0_i32_0 : i32, i32
  }
  func.func @transform_4(%arg0: i32) -> (i32, i32) {
    %c0_i32 = arith.constant 0 : i32
    %c0_i32_0 = arith.constant 0 : i32
    %c0_i32_1 = arith.constant 0 : i32
    return %c0_i32, %c0_i32_0 : i32, i32
  }
  func.func @transform_5(%arg0: i32) -> (i32, i32) {
    %c0_i32 = arith.constant 0 : i32
    %c0_i32_0 = arith.constant 0 : i32
    return %arg0, %c0_i32 : i32, i32
  }
}

</mosaic_0001>

<llo_original>
// kernel: _attention_scores.1
$region0: #{_attention_scores.1}
  #allocation0 [shape = 'u32[]', space=smem, size = 0x4, offset = 0x4, fixed_abs, tag = 'smem constant byte address 0x4 - core index']
  #allocation1 [shape = 'u32[144,128]{1,0:T(1,128)}', space=vmem, size = 0x12000, scoped, tag = 'internal scratch']
  #allocation2 [shape = 'f32[1,1]{1,0:T(1,128)S(1)}', space=vmem, size = 0x200, scoped, tag = 'scoped memory for _attention_scores.1']
  %s0 = inlined_call_operand.vmem [shape: f32[37,32], index: 0, kind: input, shape index: {}]
  %s1 = inlined_call_operand.vmem [shape: f32[32,64], index: 1, kind: input, shape index: {}]
  %s2 = inlined_call_operand.vmem [shape: f32[1,64], index: 2, kind: input, shape index: {}]
  %s3 = inlined_call_operand.vmem [shape: f32[1,32], index: 3, kind: input, shape index: {}]
  %s4 = inlined_call_operand.<no memory space> [shape: f32[1,1], index: 4, kind: input, shape index: {}]
  %s5 = inlined_call_operand.vmem [shape: f32[37,1], index: 5, kind: output, shape index: {}]
  %s6 = sld [smem:[#allocation0]]
  $region30: #{_attention_scores.1} parent=0
    _
  %s8 = ssub.s32 1, %s6
  %s9 = scalar_select 0, %s8, %s6
  %v10 = vstv %s4
  %11 = vst [vmem:[#allocation2] sm:$0x1] %v10
  // Predicated region
  $region2: #{_attention_scores.1} parent=0 // pred_check
    _
  $region3: #{_attention_scores.1} parent=0 // pred_check_branch
    %13 = sbr.rel (0) target = $region5
  $region4: #{_attention_scores.1} parent=0 // pred_region
    _
  $region5: #{_attention_scores.1} parent=0 // pred_fallthru
    _
  // Predicated region
  $region6: #{_attention_scores.1} parent=0 // pred_check
    _
  $region7: #{_attention_scores.1} parent=0 // pred_check_branch
    %15 = sbr.rel (0) target = $region9
  $region8: #{_attention_scores.1} parent=0 // pred_region
    _
  $region9: #{_attention_scores.1} parent=0 // pred_fallthru
    _
  // Predicated region
  $region10: #{_attention_scores.1} parent=0 // pred_check
    _
  $region11: #{_attention_scores.1} parent=0 // pred_check_branch
    %17 = sbr.rel (0) target = $region13
  $region12: #{_attention_scores.1} parent=0 // pred_region
    _
  $region13: #{_attention_scores.1} parent=0 // pred_fallthru
    _
  // Predicated region
  $region14: #{_attention_scores.1} parent=0 // pred_check
    _
  $region15: #{_attention_scores.1} parent=0 // pred_check_branch
    %19 = sbr.rel (0) target = $region17
  $region16: #{_attention_scores.1} parent=0 // pred_region
    _
  $region17: #{_attention_scores.1} parent=0 // pred_fallthru
    _
  // Predicated region
  $region18: #{_attention_scores.1} parent=0 // pred_check
    _
  $region19: #{_attention_scores.1} parent=0 // pred_check_branch
    %21 = sbr.rel (0) target = $region21
  $region20: #{_attention_scores.1} parent=0 // pred_region
    _
  $region21: #{_attention_scores.1} parent=0 // pred_fallthru
    _
  %v22 = vld [vmem:[%s0] sm:$0xff]
  %v23 = vld [vmem:[%s0 + $0x8] sm:$0xff]
  %v24 = vld [vmem:[%s0 + $0x10] sm:$0xff]
  %v25 = vld [vmem:[%s0 + $0x18] sm:$0xff]
  %v26 = vld [vmem:[%s0 + $0x20] sm:$0x1f]
  %v27 = vld [vmem:[%s1] sm:$0xff]
  %v28 = vld [vmem:[%s1 + $0x8] sm:$0xff]
  %v29 = vld [vmem:[%s1 + $0x10] sm:$0xff]
  %v30 = vld [vmem:[%s1 + $0x18] sm:$0xff]
  %v31 = vld [vmem:[%s2] sm:$0x1]
  %v33 = vlaneseq
  %v34 = vshrl.u32 %v33, 7
  %v35 = vsub.s32 0, %v34
  %v36 = vrot.slane %v31, %v35
  %vm38 = vcmask 261120
  %v40 = vsel %vm38, %v22, 0
  %v43 = vsel %vm38, %v23, 0
  %v46 = vsel %vm38, %v24, 0
  %v49 = vsel %vm38, %v25, 0
  %v52 = vsel %vm38, %v26, 0
  %54 = vmatprep.subr.mxu0 0.0
  %55 = vmatpush1.msra.mxu0 %v27
  %56 = vmatprep.subr.mxu0 0.0
  %57 = vmatpush1.msra.mxu0 %v28
  %58 = vmatprep.subr.mxu0 0.0
  %59 = vmatpush1.msra.mxu0 %v29
  %60 = vmatprep.subr.mxu0 0.0
  %61 = vmatpush1.msra.mxu0 %v30
  %62 = vmatprep.subr.mxu0 0.0
  %63 = vmatpush1.msra.mxu0 0.0
  %64 = vmatprep.subr.mxu0 0.0
  %65 = vmatpush1.msra.mxu0 0.0
  %66 = vmatprep.subr.mxu0 0.0
  %67 = vmatpush1.msra.mxu0 0.0
  %68 = vmatprep.subr.mxu0 0.0
  %69 = vmatpush1.msra.mxu0 0.0
  %70 = vmatprep.subr.mxu0 0.0
  %71 = vmatpush1.msra.mxu0 0.0
  %72 = vmatprep.subr.mxu0 0.0
  %73 = vmatpush1.msra.mxu0 0.0
  %74 = vmatprep.subr.mxu0 0.0
  %75 = vmatpush1.msra.mxu0 0.0
  %76 = vmatprep.subr.mxu0 0.0
  %77 = vmatpush1.msra.mxu0 0.0
  %78 = vmatprep.subr.mxu0 0.0
  %79 = vmatpush1.msra.mxu0 0.0
  %80 = vmatprep.subr.mxu0 0.0
  %81 = vmatpush1.msra.mxu0 0.0
  %82 = vmatprep.subr.mxu0 0.0
  %83 = vmatpush1.msra.mxu0 0.0
  %84 = vmatprep.subr.mxu0 0.0
  %85 = vmatpush1.msra.mxu0 0.0
  %86 = vmatprep.subr.mxu0 0.0
  %87 = vmatpush1.msra.mxu0 0.0
  %88 = vmatprep.subr.mxu0 0.0
  %89 = vmatpush1.msra.mxu0 0.0
  %90 = vmatprep.subr.mxu0 0.0
  %91 = vmatpush1.msra.mxu0 0.0
  %92 = vmatprep.subr.mxu0 0.0
  %93 = vmatpush1.msra.mxu0 0.0
  %94 = vmatprep.subr.mxu0 0.0
  %95 = vmatpush1.msra.mxu0 0.0
  %96 = vmatprep.subr.mxu0 0.0
  %97 = vmatpush1.msra.mxu0 0.0
  %98 = vmatprep.subr.mxu0 0.0
  %99 = vmatpush1.msra.mxu0 0.0
  %100 = vmatprep.subr.mxu0 0.0
  %101 = vmatpush1.msra.mxu0 0.0
  %102 = vmatprep.subr.mxu0 0.0
  %103 = vmatpush1.msra.mxu0 0.0
  %104 = vmatprep.subr.mxu0 0.0
  %105 = vmatpush1.msra.mxu0 0.0
  %106 = vmatprep.subr.mxu0 0.0
  %107 = vmatpush1.msra.mxu0 0.0
  %108 = vmatprep.subr.mxu0 0.0
  %109 = vmatpush1.msra.mxu0 0.0
  %110 = vmatprep.subr.mxu0 0.0
  %111 = vmatpush1.msra.mxu0 0.0
  %112 = vmatprep.subr.mxu0 0.0
  %113 = vmatpush1.msra.mxu0 0.0
  %114 = vmatprep.subr.mxu0 0.0
  %115 = vmatpush1.msra.mxu0 0.0
  %116 = vmatprep.subr.mxu0 0.0
  %117 = vmatpush1.msra.mxu0 0.0
  %118 = vmatprep.mubr.f32.mxu0 0.0
  %119 = vmatmul.mubr.f32.gmra.mrb[0].mxu0 %v40
  %v120 = vpop.f32.mrb[0].mxu0
  %v121 = vadd.f32 %v36, %v120
  %v122 = vpop.f32.mrb[0].mxu0
  %123 = vmatprep.mubr.f32.mxu0 0.0
  %124 = vmatmul.mubr.f32.gmra.mrb[0].mxu0 %v43
  %v125 = vpop.f32.mrb[0].mxu0
  %v126 = vadd.f32 %v36, %v125
  %v127 = vpop.f32.mrb[0].mxu0
  %128 = vmatprep.mubr.f32.mxu0 0.0
  %129 = vmatmul.mubr.f32.gmra.mrb[0].mxu0 %v46
  %v130 = vpop.f32.mrb[0].mxu0
  %v131 = vadd.f32 %v36, %v130
  %v132 = vpop.f32.mrb[0].mxu0
  %133 = vmatprep.mubr.f32.mxu0 0.0
  %134 = vmatmul.mubr.f32.gmra.mrb[0].mxu0 %v49
  %v135 = vpop.f32.mrb[0].mxu0
  %v136 = vadd.f32 %v36, %v135
  %v137 = vpop.f32.mrb[0].mxu0
  %138 = vmatprep.mubr.f32.mxu0 0.0
  %139 = vmatmul.mubr.f32.gmra.mrb[0].mxu0 %v52
  %v140 = vpop.f32.mrb[0].mxu0
  %v141 = vadd.f32 %v36, %v140
  %v142 = vpop.f32.mrb[0].mxu0
  %143 = vdwg.mxu0
  %v144 = vtanh.pop %v121
  %v145 = vtanh.pop %v126
  %v146 = vtanh.pop %v131
  %v147 = vtanh.pop %v136
  %v148 = vtanh.pop %v141
  %v149 = vxor.u32 %v121, 2147483648
  %v150 = vxor.u32 %v126, 2147483648
  %v151 = vxor.u32 %v131, 2147483648
  %v152 = vxor.u32 %v136, 2147483648
  %v153 = vxor.u32 %v141, 2147483648
  %v154 = vmul.f32 %v149, 1.442695
  %v155 = vpow.pop %v154
  %v156 = vmul.f32 %v150, 1.442695
  %v157 = vpow.pop %v156
  %v158 = vmul.f32 %v151, 1.442695
  %v159 = vpow.pop %v158
  %v160 = vmul.f32 %v152, 1.442695
  %v161 = vpow.pop %v160
  %v162 = vmul.f32 %v153, 1.442695
  %v163 = vpow.pop %v162
  %v164 = vadd.f32 %v155, 1.0
  %v165 = vadd.f32 %v157, 1.0
  %v166 = vadd.f32 %v159, 1.0
  %v167 = vadd.f32 %v161, 1.0
  %v168 = vadd.f32 %v163, 1.0
  %v169 = vrcp.pop %v164
  %v170 = vmul.f32 1.0, %v169
  %v171 = vrcp.pop %v165
  %v172 = vmul.f32 1.0, %v171
  %v173 = vrcp.pop %v166
  %v174 = vmul.f32 1.0, %v173
  %v175 = vrcp.pop %v167
  %v176 = vmul.f32 1.0, %v175
  %v177 = vrcp.pop %v168
  %v178 = vmul.f32 1.0, %v177
  %184 = vrot.lane.b32.xlu0 %v170, 96
  %v185 = vpop.permute.xlu0 %184
  %186 = vrot.lane.b32.xlu0 %v172, 96
  %v187 = vpop.permute.xlu0 %186
  %188 = vrot.lane.b32.xlu0 %v174, 96
  %v189 = vpop.permute.xlu0 %188
  %190 = vrot.lane.b32.xlu0 %v176, 96
  %v191 = vpop.permute.xlu0 %190
  %192 = vrot.lane.b32.xlu0 %v178, 96
  %v193 = vpop.permute.xlu0 %192
  %v199 = vmul.f32 %v144, %v185
  %v200 = vmul.f32 %v145, %v187
  %v201 = vmul.f32 %v146, %v189
  %v202 = vmul.f32 %v147, %v191
  %v203 = vmul.f32 %v148, %v193
  %v204 = vld [vmem:[%s3] sm:$0x1]
  %v206 = vlaneseq
  %v207 = vshrl.u32 %v206, 7
  %v208 = vsub.s32 0, %v207
  %v209 = vrot.slane %v204, %v208
  %v211 = vmul.f32 %v199, %v209
  %v212 = vmul.f32 %v200, %v209
  %v213 = vmul.f32 %v201, %v209
  %v214 = vmul.f32 %v202, %v209
  %v215 = vmul.f32 %v203, %v209
  %v216 = vsel %vm38, %v211, 0.0
  %217 = vadd.xlane.f32.xlu0 %v216
  %v218 = vpop.xlane.xlu0 %217
  %v219 = vsel %vm38, %v212, 0.0
  %220 = vadd.xlane.f32.xlu0 %v219
  %v221 = vpop.xlane.xlu0 %220
  %v222 = vsel %vm38, %v213, 0.0
  %223 = vadd.xlane.f32.xlu0 %v222
  %v224 = vpop.xlane.xlu0 %223
  %v225 = vsel %vm38, %v214, 0.0
  %226 = vadd.xlane.f32.xlu0 %v225
  %v227 = vpop.xlane.xlu0 %226
  %vm228 = vcmask 258048
  %v229 = vsel %vm228, %v215, 0.0
  %230 = vadd.xlane.f32.xlu0 %v229
  %v231 = vpop.xlane.xlu0 %230
  %v232 = vld [vmem:[#allocation2] sm:$0x1]
  %v234 = vlaneseq
  %v235 = vshrl.u32 %v234, 7
  %v236 = vsub.s32 0, %v235
  %v237 = vrot.slane %v232, %v236
  %v239 = vadd.f32 %v218, %v237
  %v240 = vadd.f32 %v221, %v237
  %v241 = vadd.f32 %v224, %v237
  %v242 = vadd.f32 %v227, %v237
  %v243 = vadd.f32 %v231, %v237
  %vm244 = vcmask 7168
  %245 = vst.msk [vmem:[%s5] sm:$0xff] %vm244, %v239
  %246 = vst.msk [vmem:[%s5 + $0x8] sm:$0xff] %vm244, %v240
  %247 = vst.msk [vmem:[%s5 + $0x10] sm:$0xff] %vm244, %v241
  %248 = vst.msk [vmem:[%s5 + $0x18] sm:$0xff] %vm244, %v242
  %vm249 = vcmask 4096
  %250 = vst.msk [vmem:[%s5 + $0x20] sm:$0x1f] %vm249, %v243
  // Predicated region
  $region22: #{_attention_scores.1} parent=0 // pred_check
    _
  $region23: #{_attention_scores.1} parent=0 // pred_check_branch
    %252 = sbr.rel (0) target = $region25
  $region24: #{_attention_scores.1} parent=0 // pred_region
    _
  $region25: #{_attention_scores.1} parent=0 // pred_fallthru
    _
  // Predicated region
  $region26: #{_attention_scores.1} parent=0 // pred_check
    _
  $region27: #{_attention_scores.1} parent=0 // pred_check_branch
    %254 = sbr.rel (0) target = $region29
  $region28: #{_attention_scores.1} parent=0 // pred_region
    _
  $region29: #{_attention_scores.1} parent=0 // pred_fallthru
    _

</llo_original>
